<compile_context>
chip_gen: v7x
topology: tpu7x:2x2x1
jax: 0.10.0
libtpu: 0.0.40
codegen_flags: <defaults>
</compile_context>

<pallas_src>
import jax
import jax.numpy as jnp
from jax.experimental import pallas as pl
from jax.experimental.pallas import tpu as pltpu


def _round_up(x, m):
    return ((x + m - 1) // m) * m


def _pwff_kernel(x_ref, w1_ref, b1_ref, w2_ref, b2_ref, o_ref):
    # x_ref:  (TM, GW)   bf16 rows of tokens, one joint-group of lanes
    # w1_ref: (GW, GW)   bf16 block-diagonal ff1 weights (y = x @ W)
    # b1_ref: (1,  GW)   f32
    # w2_ref: (GW, GW)   bf16 block-diagonal ff2 weights
    # b2_ref: (1,  GW)   f32
    # o_ref:  (TM, GW)
    x = x_ref[...]
    h = jnp.dot(x, w1_ref[...], preferred_element_type=jnp.float32)
    h = jnp.maximum(h + b1_ref[...], 0.0)
    h = h.astype(x.dtype)  # back to bf16 for the second MXU pass
    y = jnp.dot(h, w2_ref[...], preferred_element_type=jnp.float32) + b2_ref[...]
    o_ref[...] = y.astype(o_ref.dtype)


def pack_pwff_params(w1, b1, w2, b2, *, group_width=256,
                     compute_dtype=jnp.bfloat16):
    """Pack per-joint weights once (hoisted out of the per-call path).

    w1, w2: (J, D, D) with per-joint semantics  y = x @ w[j]
            (i.e. already the transpose of torch Linear's .weight).
    b1, b2: (J, D).
    Returns (w1_bd, b1_g, w2_bd, b2_g) with shapes
            (JG, GW, GW) bf16, (JG, 1, GW) f32, ... where JG*GW == J*D.
    """
    J, D, _ = w1.shape
    JD = J * D

    # Pick the group lane width: prefer 256 (full v6e/v7x MXU), then 128,
    # else fall back to a single JD-wide group.
    GW = JD
    for cand in (group_width, 128):
        if JD % cand == 0 and cand % D == 0:
            GW = cand
            break
    JG = JD // GW
    gj = GW // D  # joints per group

    def group_block_diag(w):
        # (J, D, D) -> (JG, GW, GW) block-diagonal per joint-group.
        wg = w.reshape(JG, gj, D, D)
        idx = jnp.arange(gj)
        bd = jnp.zeros((JG, gj, D, gj, D), dtype=w.dtype)
        # advanced indices separated by a slice -> indexed dims move to front,
        # so the values must be laid out as (gj, JG, D, D).
        bd = bd.at[:, idx, :, idx, :].set(jnp.transpose(wg, (1, 0, 2, 3)))
        return bd.reshape(JG, GW, GW).astype(compute_dtype)

    w1_bd = group_block_diag(w1)
    w2_bd = group_block_diag(w2)
    b1_g = b1.reshape(JG, 1, GW).astype(jnp.float32)
    b2_g = b2.reshape(JG, 1, GW).astype(jnp.float32)
    return w1_bd, b1_g, w2_bd, b2_g


def pointwise_feed_forward(inputs, packed_params, *, tm=2048,
                           compute_dtype=jnp.bfloat16, out_dtype=None):
    """inputs: (B, T, J, D).  packed_params: output of pack_pwff_params.
    Returns (B, T, J, D) in out_dtype (defaults to inputs.dtype)."""
    w1_bd, b1_g, w2_bd, b2_g = packed_params
    B, T, J, D = inputs.shape
    M = B * T
    JD = J * D
    JG, GW, _ = w1_bd.shape
    assert JG * GW == JD, "packed params do not match (J, D)"

    out_dtype = inputs.dtype if out_dtype is None else out_dtype

    # Contiguous reshape only — no transpose / HBM relayout — then bf16 I/O.
    x = inputs.reshape(M, JD).astype(compute_dtype)

    # Row tile: multiple of 8 sublanes; guarantee >= 2 grid steps when M > 8
    # so the "parallel" row axis shards across both v7x TensorCores; cap at
    # `tm` rows to keep the pipelined VMEM working set a few MiB.
    if M <= 8:
        TM = M
    else:
        TM = min(tm, _round_up(pl.cdiv(M, 2), 8))
    n_rows = pl.cdiv(M, TM)

    out = pl.pallas_call(
        _pwff_kernel,
        out_shape=jax.ShapeDtypeStruct((M, JD), out_dtype),
        grid_spec=pltpu.PrefetchScalarGridSpec(
            num_scalar_prefetch=0,
            grid=(JG, n_rows),  # rows innermost -> weights stay VMEM-resident
            in_specs=[
                pl.BlockSpec((TM, GW), lambda g, m: (m, g)),
                pl.BlockSpec((None, GW, GW), lambda g, m: (g, 0, 0)),
                pl.BlockSpec((None, 1, GW), lambda g, m: (g, 0, 0)),
                pl.BlockSpec((None, GW, GW), lambda g, m: (g, 0, 0)),
                pl.BlockSpec((None, 1, GW), lambda g, m: (g, 0, 0)),
            ],
            out_specs=pl.BlockSpec((TM, GW), lambda g, m: (m, g)),
        ),
        compiler_params=pltpu.CompilerParams(
            dimension_semantics=("parallel", "parallel")),
    )(x, w1_bd, b1_g, w2_bd, b2_g)

    # (M, J*D) -> (B, T, J, D)  (== the torch concat-over-joints + reshape)
    return out.reshape(B, T, J, D)


def _reference(inputs, w1, b1, w2, b2):
    # pure-JAX f32 reference of the PyTorch forward
    h = jnp.einsum("btjd,jde->btje", inputs, w1) + b1[None, None, :, :]
    h = jnp.maximum(h, 0.0)
    y = jnp.einsum("btjd,jde->btje", h, w2) + b2[None, None, :, :]
    return y


if __name__ == "__main__":
    # config: transformer_d_model=32, num_joints=4; batch=2, seq=8
    B, T, J, D = 2, 8, 4, 32

    key = jax.random.PRNGKey(0)
    k_x, k_w1, k_b1, k_w2, k_b2 = jax.random.split(key, 5)

    inputs = jax.random.normal(k_x, (B, T, J, D), dtype=jnp.float32)

    # torch.nn.Linear init: uniform(-1/sqrt(D), 1/sqrt(D)); deterministic here.
    bound = 1.0 / (D ** 0.5)
    w1 = jax.random.uniform(k_w1, (J, D, D), minval=-bound, maxval=bound, dtype=jnp.float32)
    b1 = jax.random.uniform(k_b1, (J, D), minval=-bound, maxval=bound, dtype=jnp.float32)
    w2 = jax.random.uniform(k_w2, (J, D, D), minval=-bound, maxval=bound, dtype=jnp.float32)
    b2 = jax.random.uniform(k_b2, (J, D), minval=-bound, maxval=bound, dtype=jnp.float32)

    # Pack once (block-diagonal joint groups, bf16) — hoisted out of the call.
    packed = pack_pwff_params(w1, b1, w2, b2)

    out = pointwise_feed_forward(inputs, packed)
    out = jax.block_until_ready(out)

    ref = _reference(inputs, w1, b1, w2, b2)
    assert out.shape == (B, T, J, D), out.shape
    # bf16 data path -> bf16-appropriate tolerance vs the f32 reference.
    max_err = float(jnp.max(jnp.abs(out - ref)))
    assert jnp.allclose(out, ref, atol=3e-2, rtol=3e-2), f"mismatch vs reference (max abs err {max_err})"

    print("KERNEL_OK")
</pallas_src>

<mosaic_0001>
module attributes {stable_mosaic.version = 11 : i64} {
  func.func @_pwff_kernel(%arg0: i32, %arg1: i32, %arg2: memref<8x128xbf16, #tpu.memory_space<vmem>>, %arg3: memref<1x128x128xbf16, #tpu.memory_space<vmem>>, %arg4: memref<1x1x128xf32, #tpu.memory_space<vmem>>, %arg5: memref<1x128x128xbf16, #tpu.memory_space<vmem>>, %arg6: memref<1x1x128xf32, #tpu.memory_space<vmem>>, %arg7: memref<8x128xf32, #tpu.memory_space<vmem>>) attributes {dimension_semantics = [#tpu.dimension_semantics<parallel>, #tpu.dimension_semantics<parallel>], iteration_bounds = array<i64: 1, 2>, scalar_prefetch = 0 : i64, scratch_operands = 0 : i64, tpu.core_type = #tpu.core_type<tc>, window_params = [{transform_indices = @transform_0, window_bounds = array<i64: 8, 128>}, {transform_indices = @transform_1, window_bounds = array<i64: 1, 128, 128>}, {transform_indices = @transform_2, window_bounds = array<i64: 1, 1, 128>}, {transform_indices = @transform_3, window_bounds = array<i64: 1, 128, 128>}, {transform_indices = @transform_4, window_bounds = array<i64: 1, 1, 128>}, {transform_indices = @transform_5, window_bounds = array<i64: 8, 128>}]} {
    %c0 = arith.constant 0 : index
    %c0_0 = arith.constant 0 : index
    %0 = vector.load %arg2[%c0, %c0_0] : memref<8x128xbf16, #tpu.memory_space<vmem>>, vector<8x128xbf16>
    %c0_1 = arith.constant 0 : index
    %c0_2 = arith.constant 0 : index
    %c0_3 = arith.constant 0 : index
    %1 = vector.load %arg3[%c0_1, %c0_2, %c0_3] : memref<1x128x128xbf16, #tpu.memory_space<vmem>>, vector<1x128x128xbf16>
    %2 = vector.shape_cast %1 : vector<1x128x128xbf16> to vector<128x128xbf16>
    %cst = arith.constant dense<0.000000e+00> : vector<8x128xf32>
    %3 = tpu.matmul %0, %2, %cst {dimension_numbers = #tpu.dot_dimension_numbers<[1], [0], [0], [1], [0, 0, 1, 1], [], []>} : vector<8x128xbf16>, vector<128x128xbf16>, vector<8x128xf32> -> vector<8x128xf32>
    %c0_4 = arith.constant 0 : index
    %c0_5 = arith.constant 0 : index
    %c0_6 = arith.constant 0 : index
    %4 = vector.load %arg4[%c0_4, %c0_5, %c0_6] : memref<1x1x128xf32, #tpu.memory_space<vmem>>, vector<1x1x128xf32>
    %5 = vector.shape_cast %4 : vector<1x1x128xf32> to vector<1x128xf32>
    %6 = vector.broadcast %5 : vector<1x128xf32> to vector<8x128xf32>
    %7 = arith.addf %3, %6 : vector<8x128xf32>
    %cst_7 = arith.constant 0.000000e+00 : f32
    %8 = vector.broadcast %cst_7 : f32 to vector<8x128xf32>
    %9 = arith.maximumf %7, %8 : vector<8x128xf32>
    %10 = arith.truncf %9 : vector<8x128xf32> to vector<8x128xbf16>
    %c0_8 = arith.constant 0 : index
    %c0_9 = arith.constant 0 : index
    %c0_10 = arith.constant 0 : index
    %11 = vector.load %arg5[%c0_8, %c0_9, %c0_10] : memref<1x128x128xbf16, #tpu.memory_space<vmem>>, vector<1x128x128xbf16>
    %12 = vector.shape_cast %11 : vector<1x128x128xbf16> to vector<128x128xbf16>
    %cst_11 = arith.constant dense<0.000000e+00> : vector<8x128xf32>
    %13 = tpu.matmul %10, %12, %cst_11 {dimension_numbers = #tpu.dot_dimension_numbers<[1], [0], [0], [1], [0, 0, 1, 1], [], []>} : vector<8x128xbf16>, vector<128x128xbf16>, vector<8x128xf32> -> vector<8x128xf32>
    %c0_12 = arith.constant 0 : index
    %c0_13 = arith.constant 0 : index
    %c0_14 = arith.constant 0 : index
    %14 = vector.load %arg6[%c0_12, %c0_13, %c0_14] : memref<1x1x128xf32, #tpu.memory_space<vmem>>, vector<1x1x128xf32>
    %15 = vector.shape_cast %14 : vector<1x1x128xf32> to vector<1x128xf32>
    %16 = vector.broadcast %15 : vector<1x128xf32> to vector<8x128xf32>
    %17 = arith.addf %13, %16 : vector<8x128xf32>
    %c0_15 = arith.constant 0 : index
    %c0_16 = arith.constant 0 : index
    %18 = vector.load %arg7[%c0_15, %c0_16] : memref<8x128xf32, #tpu.memory_space<vmem>>, vector<8x128xf32>
    tpu.vector_store %arg7[%c0_15, %c0_16], %17 {strides = array<i32>} : memref<8x128xf32, #tpu.memory_space<vmem>>, vector<8x128xf32>,
    return
  }
  func.func @transform_0(%arg0: i32, %arg1: i32) -> (i32, i32) {
    %c0_i32 = arith.constant 0 : i32
    return %arg1, %arg0 : i32, i32
  }
  func.func @transform_1(%arg0: i32, %arg1: i32) -> (i32, i32, i32) {
    %c0_i32 = arith.constant 0 : i32
    %c0_i32_0 = arith.constant 0 : i32
    %c0_i32_1 = arith.constant 0 : i32
    return %arg0, %c0_i32, %c0_i32_0 : i32, i32, i32
  }
  func.func @transform_2(%arg0: i32, %arg1: i32) -> (i32, i32, i32) {
    %c0_i32 = arith.constant 0 : i32
    %c0_i32_0 = arith.constant 0 : i32
    %c0_i32_1 = arith.constant 0 : i32
    return %arg0, %c0_i32, %c0_i32_0 : i32, i32, i32
  }
  func.func @transform_3(%arg0: i32, %arg1: i32) -> (i32, i32, i32) {
    %c0_i32 = arith.constant 0 : i32
    %c0_i32_0 = arith.constant 0 : i32
    %c0_i32_1 = arith.constant 0 : i32
    return %arg0, %c0_i32, %c0_i32_0 : i32, i32, i32
  }
  func.func @transform_4(%arg0: i32, %arg1: i32) -> (i32, i32, i32) {
    %c0_i32 = arith.constant 0 : i32
    %c0_i32_0 = arith.constant 0 : i32
    %c0_i32_1 = arith.constant 0 : i32
    return %arg0, %c0_i32, %c0_i32_0 : i32, i32, i32
  }
  func.func @transform_5(%arg0: i32, %arg1: i32) -> (i32, i32) {
    %c0_i32 = arith.constant 0 : i32
    return %arg1, %arg0 : i32, i32
  }
}

</mosaic_0001>

<llo_original>
// kernel: tpu_custom_call.1
$region0: #{tpu_custom_call.1}
  #allocation0 [shape = 'u32[]', space=smem, size = 0x4, offset = 0x4, fixed_abs, tag = 'smem constant byte address 0x4 - core index']
  #allocation1 [shape = 'u32[144,128]{1,0:T(1,128)}', space=vmem, size = 0x12000, scoped, tag = 'internal scratch']
  %s0 = inlined_call_operand.hbm [shape: bf16[16,128], index: 0, kind: input, shape index: {}]
  %s1 = inlined_call_operand.hbm [shape: bf16[1,128,128], index: 1, kind: input, shape index: {}]
  %s2 = inlined_call_operand.vmem [shape: f32[1,1,128], index: 2, kind: input, shape index: {}]
  %s3 = inlined_call_operand.hbm [shape: bf16[1,128,128], index: 3, kind: input, shape index: {}]
  %s4 = inlined_call_operand.vmem [shape: f32[1,1,128], index: 4, kind: input, shape index: {}]
  %s5 = inlined_call_operand.hbm [shape: f32[16,128], index: 5, kind: output, shape index: {}]
  %s6 = sld [smem:[#allocation0]]
  $region65: #{tpu_custom_call.1} parent=0
    _
  %s8 = ssub.s32 1, %s6
  %s9 = scalar_select 0, %s8, %s6
  $region1: #{tpu_custom_call.1} parent=0
    #allocation2 [shape = 'u8[4096]{0}', space=vmem, size = 0x1000, scoped, tag = 'input window, operand 0']
    #allocation3 [shape = 's32[2]{0}', space=sflag, size = 0x8, scoped, tag = 'scoped memory for tpu_custom_call.1']
    #allocation4 [shape = 's32[2]{0}', space=sflag, size = 0x8, scoped, tag = 'scoped memory for tpu_custom_call.1']
    #allocation5 [shape = 'u8[32768]{0}', space=vmem, size = 0x8000, scoped, tag = 'input window, operand 1, single buffered']
    #allocation6 [shape = 's32[1]{0}', space=sflag, size = 0x4, scoped, tag = 'scoped memory for tpu_custom_call.1']
    #allocation7 [shape = 'u8[32768]{0}', space=vmem, size = 0x8000, scoped, tag = 'input window, operand 3, single buffered']
    #allocation8 [shape = 'u8[8192]{0}', space=vmem, size = 0x2000, scoped, tag = 'output window, operand 0']
    %10 = vsyncpa [#allocation3], 0
    %s11 = scalar_lea.sflag [#allocation3], 1
    %12 = vsyncpa %s11, 0
    %13 = vsyncpa [#allocation6], 0
    %14 = vsyncpa [#allocation4], 0
    %s15 = scalar_lea.sflag [#allocation4], 1
    %16 = vsyncpa %s15, 0
    loop: start=0, step=1, limit=4
    $region2: #{tpu_custom_call.1} parent=1 // loop_pre_header
      _
    $region3: #{tpu_custom_call.1} parent=1 // loop_header
      %s18 = sphi 0, %s22
      %p19 = scmp.ge.s32.totalorder %s18, 4
      %s25 = sphi 0, %s37
      %s26 = sphi 0, %s33
      %s27 = sphi 0, %s25
      %s28 = sphi 0, %s26
      %s29 = sphi 0, %s27
      %s30 = sphi 0, %s28
      %s42 = sphi 0, %s44
      %s45 = sphi 0, %s42
      %s46 = sphi 0, %s45
      %s62 = sphi 0, %s46
      %s68 = sphi 0, %s70
      %s71 = sphi 0, %s68
      %s72 = sphi 0, %s71
      %s88 = sphi 0, %s72
      %s94 = sphi 0, %s96
      %s97 = sphi 0, %s94
      %s98 = sphi 0, %s97
      %s114 = sphi 0, %s98
      %s120 = sphi 0, %s122
      %s123 = sphi 0, %s120
      %s124 = sphi 0, %s123
      %s140 = sphi 0, %s124
      %s146 = sphi 0, %s148
      %s149 = sphi 0, %s146
      %s150 = sphi 0, %s149
      %s166 = sphi 0, %s150
      %s174 = sphi 0, %s176
      %s177 = sphi 0, %s174
      %s178 = sphi 0, %s177
      %s194 = sphi 0, %s178
    $region4: #{tpu_custom_call.1} parent=1 // loop_header_branch
      %21 = sbr.rel (%p19) target = $region8
    $region5: #{tpu_custom_call.1} parent=1 // loop_body
      %s23 = ssub.s32 %s18, 1
      %s24 = ssub.s32 %s18, 2
      %s31 = sadd.s32 1, %s26
      %p32 = scmp.ge.s32.totalorder %s31, 2
      %s33 = scalar_select %p32, 0, %s31
      %s34 = sadd.s32 1, %s25
      %s35 = scalar_select %p32, %s34, %s25
      %p36 = scmp.ge.s32.totalorder %s35, 1
      %s37 = scalar_select %p36, 0, %s35
      %s38 = ssub.s32 %s26, %s33
      %s39 = ssub.s32 %s25, %s37
      %s40 = sor.u32 %s38, %s39
      %p41 = scmp.eq.s32.totalorder %s40, 0
      %s43 = sadd.s32 %s42, 1
      %s44 = scalar_select %p41, %s42, %s43
      %p47 = pneg %p41
      %p48 = scmp.eq.s32.totalorder %s18, 1
      %p49 = por %p47, %p48
      %p50 = scmp.ne.s32.totalorder %s42, %s45
      %p51 = scmp.eq.s32.totalorder %s18, 0
      %p52 = por %p50, %p51
      %p53 = scmp.ne.s32.totalorder %s42, %s45
      %p54 = scmp.eq.s32.totalorder %s23, 1
      %p55 = por %p53, %p54
      %p56 = scmp.ne.s32.totalorder %s45, %s46
      %p57 = scmp.eq.s32.totalorder %s23, 0
      %p58 = por %p56, %p57
      %p59 = scmp.ne.s32.totalorder %s45, %s46
      %p60 = scmp.eq.s32.totalorder %s24, 1
      %p61 = por %p59, %p60
      %p63 = scmp.ne.s32.totalorder %s46, %s62
      %p64 = scmp.eq.s32.totalorder %s24, 0
      %p65 = por %p63, %p64
      %s66 = ssub.s32 %s25, %s37
      %p67 = scmp.eq.s32.totalorder %s66, 0
      %s69 = sadd.s32 %s68, 1
      %s70 = scalar_select %p67, %s68, %s69
      %p73 = pneg %p67
      %p74 = scmp.eq.s32.totalorder %s18, 1
      %p75 = por %p73, %p74
      %p76 = scmp.ne.s32.totalorder %s68, %s71
      %p77 = scmp.eq.s32.totalorder %s18, 0
      %p78 = por %p76, %p77
      %p79 = scmp.ne.s32.totalorder %s68, %s71
      %p80 = scmp.eq.s32.totalorder %s23, 1
      %p81 = por %p79, %p80
      %p82 = scmp.ne.s32.totalorder %s71, %s72
      %p83 = scmp.eq.s32.totalorder %s23, 0
      %p84 = por %p82, %p83
      %p85 = scmp.ne.s32.totalorder %s71, %s72
      %p86 = scmp.eq.s32.totalorder %s24, 1
      %p87 = por %p85, %p86
      %p89 = scmp.ne.s32.totalorder %s72, %s88
      %p90 = scmp.eq.s32.totalorder %s24, 0
      %p91 = por %p89, %p90
      %s92 = ssub.s32 %s25, %s37
      %p93 = scmp.eq.s32.totalorder %s92, 0
      %s95 = sadd.s32 %s94, 1
      %s96 = scalar_select %p93, %s94, %s95
      %p99 = pneg %p93
      %p100 = scmp.eq.s32.totalorder %s18, 1
      %p101 = por %p99, %p100
      %p102 = scmp.ne.s32.totalorder %s94, %s97
      %p103 = scmp.eq.s32.totalorder %s18, 0
      %p104 = por %p102, %p103
      %p105 = scmp.ne.s32.totalorder %s94, %s97
      %p106 = scmp.eq.s32.totalorder %s23, 1
      %p107 = por %p105, %p106
      %p108 = scmp.ne.s32.totalorder %s97, %s98
      %p109 = scmp.eq.s32.totalorder %s23, 0
      %p110 = por %p108, %p109
      %p111 = scmp.ne.s32.totalorder %s97, %s98
      %p112 = scmp.eq.s32.totalorder %s24, 1
      %p113 = por %p111, %p112
      %p115 = scmp.ne.s32.totalorder %s98, %s114
      %p116 = scmp.eq.s32.totalorder %s24, 0
      %p117 = por %p115, %p116
      %s118 = ssub.s32 %s25, %s37
      %p119 = scmp.eq.s32.totalorder %s118, 0
      %s121 = sadd.s32 %s120, 1
      %s122 = scalar_select %p119, %s120, %s121
      %p125 = pneg %p119
      %p126 = scmp.eq.s32.totalorder %s18, 1
      %p127 = por %p125, %p126
      %p128 = scmp.ne.s32.totalorder %s120, %s123
      %p129 = scmp.eq.s32.totalorder %s18, 0
      %p130 = por %p128, %p129
      %p131 = scmp.ne.s32.totalorder %s120, %s123
      %p132 = scmp.eq.s32.totalorder %s23, 1
      %p133 = por %p131, %p132
      %p134 = scmp.ne.s32.totalorder %s123, %s124
      %p135 = scmp.eq.s32.totalorder %s23, 0
      %p136 = por %p134, %p135
      %p137 = scmp.ne.s32.totalorder %s123, %s124
      %p138 = scmp.eq.s32.totalorder %s24, 1
      %p139 = por %p137, %p138
      %p141 = scmp.ne.s32.totalorder %s124, %s140
      %p142 = scmp.eq.s32.totalorder %s24, 0
      %p143 = por %p141, %p142
      %s144 = ssub.s32 %s25, %s37
      %p145 = scmp.eq.s32.totalorder %s144, 0
      %s147 = sadd.s32 %s146, 1
      %s148 = scalar_select %p145, %s146, %s147
      %p151 = pneg %p145
      %p152 = scmp.eq.s32.totalorder %s18, 1
      %p153 = por %p151, %p152
      %p154 = scmp.ne.s32.totalorder %s146, %s149
      %p155 = scmp.eq.s32.totalorder %s18, 0
      %p156 = por %p154, %p155
      %p157 = scmp.ne.s32.totalorder %s146, %s149
      %p158 = scmp.eq.s32.totalorder %s23, 1
      %p159 = por %p157, %p158
      %p160 = scmp.ne.s32.totalorder %s149, %s150
      %p161 = scmp.eq.s32.totalorder %s23, 0
      %p162 = por %p160, %p161
      %p163 = scmp.ne.s32.totalorder %s149, %s150
      %p164 = scmp.eq.s32.totalorder %s24, 1
      %p165 = por %p163, %p164
      %p167 = scmp.ne.s32.totalorder %s150, %s166
      %p168 = scmp.eq.s32.totalorder %s24, 0
      %p169 = por %p167, %p168
      %s170 = ssub.s32 %s26, %s33
      %s171 = ssub.s32 %s25, %s37
      %s172 = sor.u32 %s170, %s171
      %p173 = scmp.eq.s32.totalorder %s172, 0
      %s175 = sadd.s32 %s174, 1
      %s176 = scalar_select %p173, %s174, %s175
      %p179 = pneg %p173
      %p180 = scmp.eq.s32.totalorder %s18, 1
      %p181 = por %p179, %p180
      %p182 = scmp.ne.s32.totalorder %s174, %s177
      %p183 = scmp.eq.s32.totalorder %s18, 0
      %p184 = por %p182, %p183
      %p185 = scmp.ne.s32.totalorder %s174, %s177
      %p186 = scmp.eq.s32.totalorder %s23, 1
      %p187 = por %p185, %p186
      %p188 = scmp.ne.s32.totalorder %s177, %s178
      %p189 = scmp.eq.s32.totalorder %s23, 0
      %p190 = por %p188, %p189
      %p191 = scmp.ne.s32.totalorder %s177, %s178
      %p192 = scmp.eq.s32.totalorder %s24, 1
      %p193 = por %p191, %p192
      %p195 = scmp.ne.s32.totalorder %s178, %s194
      %p196 = scmp.eq.s32.totalorder %s24, 0
      %p197 = por %p195, %p196
      %p198 = scmp.le.s32.totalorder 1, %s18
      %p199 = scmp.lt.s32.totalorder %s18, 3
      %p200 = pnand %p198, %p199
      %p201 = pneg %p200
      // Predicated region
      $region9: #{tpu_custom_call.1} parent=5 // pred_check
        _
      $region10: #{tpu_custom_call.1} parent=5 // pred_check_branch
        %203 = sbr.rel (%p200) target = $region12
      $region11: #{tpu_custom_call.1} parent=5 // pred_region
        %s204 = ssub.s32 %s18, 1
        // Predicated region
        $region13: #{tpu_custom_call.1} parent=11 // pred_check
          %p205 = pneg %p84
        $region14: #{tpu_custom_call.1} parent=11 // pred_check_branch
          %207 = sbr.rel (%p205) target = $region16
        $region15: #{tpu_custom_call.1} parent=11 // pred_region
          %s209 = ssub.s32 1024, 1024
          %210 = vsyncadd [#allocation6], %s209
          %s211 = smul.addr %s27, 16
          %s212 = smul.addr %s211, 64
          %s213 = scalar_lea.hbm %s1, %s212
          %s214 = sshll.u32 [#allocation5], 4
          %s215 = int_to_ptr.vmem [resolvable:$true] %s214
          %220 = dma.hbm_to_vmem [thread:$0]  %s213, 1024, %s215, [#allocation6], 64, 64, 4
        $region16: #{tpu_custom_call.1} parent=11 // pred_fallthru
          _
        // Predicated region
        $region17: #{tpu_custom_call.1} parent=11 // pred_check
          %p221 = pneg %p110
        $region18: #{tpu_custom_call.1} parent=11 // pred_check_branch
          %223 = sbr.rel (%p221) target = $region20
        $region19: #{tpu_custom_call.1} parent=11 // pred_region
          %p224 = scmp.lt.s32.totalorder %s27, 0
          %s225 = scalar_select %p224, %s27, 0
          %s226 = scalar_lea.vmem %s2, %s225
        $region20: #{tpu_custom_call.1} parent=11 // pred_fallthru
          _
        // Predicated region
        $region21: #{tpu_custom_call.1} parent=11 // pred_check
          %p227 = pneg %p136
        $region22: #{tpu_custom_call.1} parent=11 // pred_check_branch
          %229 = sbr.rel (%p227) target = $region24
        $region23: #{tpu_custom_call.1} parent=11 // pred_region
          %s231 = ssub.s32 1024, 1024
          %232 = vsyncadd [#allocation6], %s231
          %s233 = smul.addr %s27, 16
          %s234 = smul.addr %s233, 64
          %s235 = scalar_lea.hbm %s3, %s234
          %s236 = sshll.u32 [#allocation7], 4
          %s237 = int_to_ptr.vmem [resolvable:$true] %s236
          %242 = dma.hbm_to_vmem [thread:$0]  %s235, 1024, %s237, [#allocation6], 64, 64, 4
        $region24: #{tpu_custom_call.1} parent=11 // pred_fallthru
          _
        // Predicated region
        $region25: #{tpu_custom_call.1} parent=11 // pred_check
          %p243 = pneg %p162
        $region26: #{tpu_custom_call.1} parent=11 // pred_check_branch
          %245 = sbr.rel (%p243) target = $region28
        $region27: #{tpu_custom_call.1} parent=11 // pred_region
          %p246 = scmp.lt.s32.totalorder %s27, 0
          %s247 = scalar_select %p246, %s27, 0
          %s248 = scalar_lea.vmem %s4, %s247
        $region28: #{tpu_custom_call.1} parent=11 // pred_fallthru
          _
      $region12: #{tpu_custom_call.1} parent=5 // pred_fallthru
        _
      %p249 = scmp.lt.s32.totalorder %s18, 2
      // Predicated region
      $region29: #{tpu_custom_call.1} parent=5 // pred_check
        %p250 = pneg %p249
      $region30: #{tpu_custom_call.1} parent=5 // pred_check_branch
        %252 = sbr.rel (%p250) target = $region32
      $region31: #{tpu_custom_call.1} parent=5 // pred_region
        // Predicated region
        $region33: #{tpu_custom_call.1} parent=31 // pred_check
          %p253 = pneg %p52
        $region34: #{tpu_custom_call.1} parent=31 // pred_check_branch
          %255 = sbr.rel (%p253) target = $region36
        $region35: #{tpu_custom_call.1} parent=31 // pred_region
          %s256 = sand.u32 %s42, 1
          %s257 = scalar_lea.sflag [#allocation3], %s256
          %s258 = sand.u32 %s42, 1
          %s259 = smul.addr %s258, 4
          %s260 = scalar_lea.vmem [#allocation2], %s259
          %s262 = ssub.s32 64, 64
          %263 = vsyncadd %s257, %s262
          %s264 = sadd.s32 %s25, %s26
          %s265 = smul.addr %s264, 64
          %s266 = scalar_lea.hbm %s0, %s265
          %s268 = sshll.u32 %s260, 4
          %s269 = int_to_ptr.vmem [resolvable:$true] %s268
          %271 = dma.hbm_to_vmem [thread:$0]  %s266, 64, %s269, %s257
        $region36: #{tpu_custom_call.1} parent=31 // pred_fallthru
          _
      $region32: #{tpu_custom_call.1} parent=5 // pred_fallthru
        _
      %p272 = scmp.le.s32.totalorder 1, %s18
      %p273 = scmp.lt.s32.totalorder %s18, 3
      %p274 = pnand %p272, %p273
      %p275 = pneg %p274
      // Predicated region
      $region37: #{tpu_custom_call.1} parent=5 // pred_check
        _
      $region38: #{tpu_custom_call.1} parent=5 // pred_check_branch
        %277 = sbr.rel (%p274) target = $region40
      $region39: #{tpu_custom_call.1} parent=5 // pred_region
        %s278 = ssub.s32 %s18, 1
        %s279 = sand.u32 %s45, 1
        %s280 = scalar_lea.sflag [#allocation3], %s279
        %s281 = sand.u32 %s45, 1
        %s282 = smul.addr %s281, 4
        %s283 = scalar_lea.vmem [#allocation2], %s282
        // Predicated region
        $region41: #{tpu_custom_call.1} parent=39 // pred_check
          %p284 = pneg %p58
        $region42: #{tpu_custom_call.1} parent=39 // pred_check_branch
          %286 = sbr.rel (%p284) target = $region44
        $region43: #{tpu_custom_call.1} parent=39 // pred_region
          %287 = dma.done %s280, 64
        $region44: #{tpu_custom_call.1} parent=39 // pred_fallthru
          _
        // Predicated region
        $region45: #{tpu_custom_call.1} parent=39 // pred_check
          %p288 = pneg %p84
        $region46: #{tpu_custom_call.1} parent=39 // pred_check_branch
          %290 = sbr.rel (%p288) target = $region48
        $region47: #{tpu_custom_call.1} parent=39 // pred_region
          %291 = dma.done [#allocation6], 1024
        $region48: #{tpu_custom_call.1} parent=39 // pred_fallthru
          _
        // Predicated region
        $region49: #{tpu_custom_call.1} parent=39 // pred_check
          %p292 = pneg %p136
        $region50: #{tpu_custom_call.1} parent=39 // pred_check_branch
          %294 = sbr.rel (%p292) target = $region52
        $region51: #{tpu_custom_call.1} parent=39 // pred_region
          %295 = dma.done [#allocation6], 1024
        $region52: #{tpu_custom_call.1} parent=39 // pred_fallthru
          _
        %s296 = sand.u32 %s45, 1
        %s297 = scalar_lea.sflag [#allocation3], %s296
        %s298 = sand.u32 %s45, 1
        %s299 = smul.addr %s298, 4
        %s300 = scalar_lea.vmem [#allocation2], %s299
        %p301 = pneg %p58
        %p302 = pneg %p55
        %p303 = pneg %p84
        %p304 = pneg %p81
        %p305 = scmp.lt.s32.totalorder %s27, 0
        %s306 = scalar_select %p305, %s27, 0
        %s307 = scalar_lea.vmem %s2, %s306
        %p308 = pneg %p110
        %p309 = pneg %p107
        %p310 = pneg %p136
        %p311 = pneg %p133
        %p312 = scmp.lt.s32.totalorder %s27, 0
        %s313 = scalar_select %p312, %s27, 0
        %s314 = scalar_lea.vmem %s4, %s313
        %p315 = pneg %p162
        %p316 = pneg %p159
        %p317 = pneg %p190
        %p318 = pneg %p187
        %s319 = sand.u32 %s177, 1
        %s320 = scalar_lea.sflag [#allocation4], %s319
        %s321 = sand.u32 %s177, 1
        %s322 = smul.addr %s321, 8
        %s323 = scalar_lea.vmem [#allocation8], %s322
        %p324 = scmp.lt.s32.totalorder %s27, 0
        %s325 = scalar_select %p324, %s27, 0
        %s326 = scalar_lea.vmem %s2, %s325
        %p327 = scmp.lt.s32.totalorder %s27, 0
        %s328 = scalar_select %p327, %s27, 0
        %s329 = scalar_lea.vmem %s4, %s328
        %v331 = vld [vmem:[%s283] sm:$0xf]
        %v332 = vld [vmem:[#allocation5] sm:$0xf]
        %v333 = vld [vmem:[#allocation5 + $0x4] sm:$0xf]
        %v334 = vld [vmem:[#allocation5 + $0x8] sm:$0xf]
        %v335 = vld [vmem:[#allocation5 + $0xc] sm:$0xf]
        %v336 = vld [vmem:[#allocation5 + $0x10] sm:$0xf]
        %v337 = vld [vmem:[#allocation5 + $0x14] sm:$0xf]
        %v338 = vld [vmem:[#allocation5 + $0x18] sm:$0xf]
        %v339 = vld [vmem:[#allocation5 + $0x1c] sm:$0xf]
        %v340 = vld [vmem:[#allocation5 + $0x20] sm:$0xf]
        %v341 = vld [vmem:[#allocation5 + $0x24] sm:$0xf]
        %v342 = vld [vmem:[#allocation5 + $0x28] sm:$0xf]
        %v343 = vld [vmem:[#allocation5 + $0x2c] sm:$0xf]
        %v344 = vld [vmem:[#allocation5 + $0x30] sm:$0xf]
        %v345 = vld [vmem:[#allocation5 + $0x34] sm:$0xf]
        %v346 = vld [vmem:[#allocation5 + $0x38] sm:$0xf]
        %v347 = vld [vmem:[#allocation5 + $0x3c] sm:$0xf]
        %v348 = vld [vmem:[%s326] sm:$0x1]
        %v350 = vlaneseq
        %v351 = vshrl.u32 %v350, 7
        %v352 = vsub.s32 0, %v351
        %v353 = vrot.slane %v348, %v352
        %v371 = vunpack.c.l.b16 %v332
        %v372 = vunpack.c.l.b16 %v333
        %v373 = vunpack.c.l.b16 %v334
        %v374 = vunpack.c.l.b16 %v335
        %v375 = vunpack.c.l.b16 %v336
        %v376 = vunpack.c.l.b16 %v337
        %v377 = vunpack.c.l.b16 %v338
        %v378 = vunpack.c.l.b16 %v339
        %v379 = vunpack.c.l.b16 %v340
        %v380 = vunpack.c.l.b16 %v341
        %v381 = vunpack.c.l.b16 %v342
        %v382 = vunpack.c.l.b16 %v343
        %v383 = vunpack.c.l.b16 %v344
        %v384 = vunpack.c.l.b16 %v345
        %v385 = vunpack.c.l.b16 %v346
        %v386 = vunpack.c.l.b16 %v347
        %v387 = vpack.c.b16 %v372, %v371
        %v388 = vpack.c.b16 %v374, %v373
        %v389 = vpack.c.b16 %v376, %v375
        %v390 = vpack.c.b16 %v378, %v377
        %v391 = vpack.c.b16 %v380, %v379
        %v392 = vpack.c.b16 %v382, %v381
        %v393 = vpack.c.b16 %v384, %v383
        %v394 = vpack.c.b16 %v386, %v385
        %403 = vmatprep.subr.bf16.mxu0 0
        %404 = vmatpush1.bf16.msra.mxu0 %v387
        %405 = vmatprep.subr.bf16.mxu0 0
        %406 = vmatpush1.bf16.msra.mxu0 %v388
        %407 = vmatprep.subr.bf16.mxu0 0
        %408 = vmatpush1.bf16.msra.mxu0 %v389
        %409 = vmatprep.subr.bf16.mxu0 0
        %410 = vmatpush1.bf16.msra.mxu0 %v390
        %411 = vmatprep.subr.bf16.mxu0 0
        %412 = vmatpush1.bf16.msra.mxu0 %v391
        %413 = vmatprep.subr.bf16.mxu0 0
        %414 = vmatpush1.bf16.msra.mxu0 %v392
        %415 = vmatprep.subr.bf16.mxu0 0
        %416 = vmatpush1.bf16.msra.mxu0 %v393
        %417 = vmatprep.subr.bf16.mxu0 0
        %418 = vmatpush1.bf16.msra.mxu0 %v394
        %419 = vmatprep.subr.bf16.mxu0 0
        %420 = vmatpush1.bf16.msra.mxu0 0
        %421 = vmatprep.subr.bf16.mxu0 0
        %422 = vmatpush1.bf16.msra.mxu0 0
        %423 = vmatprep.subr.bf16.mxu0 0
        %424 = vmatpush1.bf16.msra.mxu0 0
        %425 = vmatprep.subr.bf16.mxu0 0
        %426 = vmatpush1.bf16.msra.mxu0 0
        %427 = vmatprep.subr.bf16.mxu0 0
        %428 = vmatpush1.bf16.msra.mxu0 0
        %429 = vmatprep.subr.bf16.mxu0 0
        %430 = vmatpush1.bf16.msra.mxu0 0
        %431 = vmatprep.subr.bf16.mxu0 0
        %432 = vmatpush1.bf16.msra.mxu0 0
        %433 = vmatprep.subr.bf16.mxu0 0
        %434 = vmatpush1.bf16.msra.mxu0 0
        %435 = vmatprep.mubr.bf16.mxu0 0
        %436 = vmatmul.mubr.bf16.gmra.mrb[0].mxu0 %v331
        %v437 = vpop.f32.mrb[0].mxu0
        %v438 = vadd.f32 %v353, %v437
        %v439 = vpop.f32.mrb[0].mxu0
        %v440 = vpop.f32.mrb[0].mxu0
        %v441 = vpop.f32.mrb[0].mxu0
        %442 = vdwg.mxu0
        %v443 = vmax.f32 %v438, 0.0
        %v444 = vpack.c.bf16 %v443, %v443
        %v445 = vld [vmem:[#allocation7] sm:$0xf]
        %v446 = vld [vmem:[#allocation7 + $0x4] sm:$0xf]
        %v447 = vld [vmem:[#allocation7 + $0x8] sm:$0xf]
        %v448 = vld [vmem:[#allocation7 + $0xc] sm:$0xf]
        %v449 = vld [vmem:[#allocation7 + $0x10] sm:$0xf]
        %v450 = vld [vmem:[#allocation7 + $0x14] sm:$0xf]
        %v451 = vld [vmem:[#allocation7 + $0x18] sm:$0xf]
        %v452 = vld [vmem:[#allocation7 + $0x1c] sm:$0xf]
        %v453 = vld [vmem:[#allocation7 + $0x20] sm:$0xf]
        %v454 = vld [vmem:[#allocation7 + $0x24] sm:$0xf]
        %v455 = vld [vmem:[#allocation7 + $0x28] sm:$0xf]
        %v456 = vld [vmem:[#allocation7 + $0x2c] sm:$0xf]
        %v457 = vld [vmem:[#allocation7 + $0x30] sm:$0xf]
        %v458 = vld [vmem:[#allocation7 + $0x34] sm:$0xf]
        %v459 = vld [vmem:[#allocation7 + $0x38] sm:$0xf]
        %v460 = vld [vmem:[#allocation7 + $0x3c] sm:$0xf]
        %v461 = vld [vmem:[%s329] sm:$0x1]
        %v463 = vlaneseq
        %v464 = vshrl.u32 %v463, 7
        %v465 = vsub.s32 0, %v464
        %v466 = vrot.slane %v461, %v465
        %v484 = vunpack.c.l.b16 %v445
        %v485 = vunpack.c.l.b16 %v446
        %v486 = vunpack.c.l.b16 %v447
        %v487 = vunpack.c.l.b16 %v448
        %v488 = vunpack.c.l.b16 %v449
        %v489 = vunpack.c.l.b16 %v450
        %v490 = vunpack.c.l.b16 %v451
        %v491 = vunpack.c.l.b16 %v452
        %v492 = vunpack.c.l.b16 %v453
        %v493 = vunpack.c.l.b16 %v454
        %v494 = vunpack.c.l.b16 %v455
        %v495 = vunpack.c.l.b16 %v456
        %v496 = vunpack.c.l.b16 %v457
        %v497 = vunpack.c.l.b16 %v458
        %v498 = vunpack.c.l.b16 %v459
        %v499 = vunpack.c.l.b16 %v460
        %v500 = vpack.c.b16 %v485, %v484
        %v501 = vpack.c.b16 %v487, %v486
        %v502 = vpack.c.b16 %v489, %v488
        %v503 = vpack.c.b16 %v491, %v490
        %v504 = vpack.c.b16 %v493, %v492
        %v505 = vpack.c.b16 %v495, %v494
        %v506 = vpack.c.b16 %v497, %v496
        %v507 = vpack.c.b16 %v499, %v498
        %516 = vmatprep.subr.bf16.mxu0 0
        %517 = vmatpush1.bf16.msra.mxu0 %v500
        %518 = vmatprep.subr.bf16.mxu0 0
        %519 = vmatpush1.bf16.msra.mxu0 %v501
        %520 = vmatprep.subr.bf16.mxu0 0
        %521 = vmatpush1.bf16.msra.mxu0 %v502
        %522 = vmatprep.subr.bf16.mxu0 0
        %523 = vmatpush1.bf16.msra.mxu0 %v503
        %524 = vmatprep.subr.bf16.mxu0 0
        %525 = vmatpush1.bf16.msra.mxu0 %v504
        %526 = vmatprep.subr.bf16.mxu0 0
        %527 = vmatpush1.bf16.msra.mxu0 %v505
        %528 = vmatprep.subr.bf16.mxu0 0
        %529 = vmatpush1.bf16.msra.mxu0 %v506
        %530 = vmatprep.subr.bf16.mxu0 0
        %531 = vmatpush1.bf16.msra.mxu0 %v507
        %532 = vmatprep.subr.bf16.mxu0 0
        %533 = vmatpush1.bf16.msra.mxu0 0
        %534 = vmatprep.subr.bf16.mxu0 0
        %535 = vmatpush1.bf16.msra.mxu0 0
        %536 = vmatprep.subr.bf16.mxu0 0
        %537 = vmatpush1.bf16.msra.mxu0 0
        %538 = vmatprep.subr.bf16.mxu0 0
        %539 = vmatpush1.bf16.msra.mxu0 0
        %540 = vmatprep.subr.bf16.mxu0 0
        %541 = vmatpush1.bf16.msra.mxu0 0
        %542 = vmatprep.subr.bf16.mxu0 0
        %543 = vmatpush1.bf16.msra.mxu0 0
        %544 = vmatprep.subr.bf16.mxu0 0
        %545 = vmatpush1.bf16.msra.mxu0 0
        %546 = vmatprep.subr.bf16.mxu0 0
        %547 = vmatpush1.bf16.msra.mxu0 0
        %548 = vmatprep.mubr.bf16.mxu0 0
        %549 = vmatmul.mubr.bf16.gmra.mrb[0].mxu0 %v444
        %v550 = vpop.f32.mrb[0].mxu0
        %v551 = vadd.f32 %v466, %v550
        %v552 = vpop.f32.mrb[0].mxu0
        %v553 = vpop.f32.mrb[0].mxu0
        %v554 = vpop.f32.mrb[0].mxu0
        %555 = vdwg.mxu0
        %556 = vst [vmem:[%s323] sm:$0xff] %v551
        %s557 = sand.u32 %s177, 1
        %s558 = scalar_lea.sflag [#allocation4], %s557
        %s559 = sand.u32 %s177, 1
        %s560 = smul.addr %s559, 8
        %s561 = scalar_lea.vmem [#allocation8], %s560
        // Predicated region
        $region53: #{tpu_custom_call.1} parent=39 // pred_check
          %p562 = pneg %p187
        $region54: #{tpu_custom_call.1} parent=39 // pred_check_branch
          %564 = sbr.rel (%p562) target = $region56
        $region55: #{tpu_custom_call.1} parent=39 // pred_region
          %s566 = ssub.s32 128, 128
          %567 = vsyncadd %s558, %s566
          %s568 = sadd.s32 %s27, %s28
          %s569 = smul.addr %s568, 128
          %s570 = scalar_lea.hbm %s5, %s569
          %s572 = sshll.u32 %s561, 4
          %s573 = int_to_ptr.vmem [resolvable:$true] %s572
          %575 = dma.vmem_to_hbm [thread:$0]  %s573, 128, %s570, %s558
        $region56: #{tpu_custom_call.1} parent=39 // pred_fallthru
          _
      $region40: #{tpu_custom_call.1} parent=5 // pred_fallthru
        _
      %p576 = scmp.le.s32.totalorder 2, %s18
      // Predicated region
      $region57: #{tpu_custom_call.1} parent=5 // pred_check
        %p577 = pneg %p576
      $region58: #{tpu_custom_call.1} parent=5 // pred_check_branch
        %579 = sbr.rel (%p577) target = $region60
      $region59: #{tpu_custom_call.1} parent=5 // pred_region
        %s580 = ssub.s32 %s18, 2
        // Predicated region
        $region61: #{tpu_custom_call.1} parent=59 // pred_check
          %p581 = pneg %p193
        $region62: #{tpu_custom_call.1} parent=59 // pred_check_branch
          %583 = sbr.rel (%p581) target = $region64
        $region63: #{tpu_custom_call.1} parent=59 // pred_region
          %s584 = sand.u32 %s178, 1
          %s585 = scalar_lea.sflag [#allocation4], %s584
          %s586 = sand.u32 %s178, 1
          %s587 = smul.addr %s586, 8
          %s588 = scalar_lea.vmem [#allocation8], %s587
          %589 = dma.done %s585, 128
        $region64: #{tpu_custom_call.1} parent=59 // pred_fallthru
          _
      $region60: #{tpu_custom_call.1} parent=5 // pred_fallthru
        _
    $region6: #{tpu_custom_call.1} parent=1 // loop_footer
      %s22 = sadd.s32 1, %s18
    $region7: #{tpu_custom_call.1} parent=1 // loop_footer_branch
      %17 = sbr.rel target = $region3
    $region8: #{tpu_custom_call.1} parent=1 // loop_exit
      _
    %590 = vsyncpa [#allocation3], 1
    %s591 = scalar_lea.sflag [#allocation3], 1
    %592 = vsyncpa %s591, 1
    %593 = vsyncpa [#allocation6], 1
    %594 = vsyncpa [#allocation4], 1
    %s595 = scalar_lea.sflag [#allocation4], 1
    %596 = vsyncpa %s595, 1

</llo_original>
